<compile_context>
chip_gen: v5e
topology: v5e:2x2
jax: 0.10.0
libtpu: 0.0.40
codegen_flags: <defaults>
</compile_context>

<pallas_src>
import functools

import jax
import jax.numpy as jnp
from jax import lax
from jax.experimental import pallas as pl
from jax.experimental.pallas import tpu as pltpu

NUM_WEIGHTS = 9


# ------------------------------ tiling helpers --------------------------------

def _pick_tile(dim, pref, align):
    """Largest tile <= pref that divides `dim` and is a multiple of `align`
    (falls back to the full dim, which is always a legal block size)."""
    if dim <= pref:
        return dim
    t = (pref // align) * align
    while t >= align:
        if dim % t == 0:
            return t
        t -= align
    return dim


# ------------------------------ tiled linear -----------------------------------

def _linear_kernel(x_ref, wt_ref, b_ref, o_ref, acc_ref):
    @pl.when(pl.program_id(2) == 0)
    def _():
        acc_ref[...] = jnp.zeros_like(acc_ref)

    acc_ref[...] += jnp.dot(x_ref[...], wt_ref[...],
                            preferred_element_type=jnp.float32)

    @pl.when(pl.program_id(2) == pl.num_programs(2) - 1)
    def _():
        o_ref[...] = (acc_ref[...] + b_ref[...]).astype(o_ref.dtype)


def pallas_linear(x2d, wt, bias, *, tm_pref=256, tn_pref=256, tk_pref=512):
    """y = x2d @ wt + bias, with wt already stored transposed as [K, N]."""
    M, K = x2d.shape
    K2, N = wt.shape
    assert K == K2
    tm = _pick_tile(M, tm_pref, 8)
    tn = _pick_tile(N, tn_pref, 128)
    tk = _pick_tile(K, tk_pref, 128)
    grid = (M // tm, N // tn, K // tk)
    return pl.pallas_call(
        _linear_kernel,
        grid=grid,
        in_specs=[pl.BlockSpec((tm, tk), lambda i, j, k: (i, k)),
                  pl.BlockSpec((tk, tn), lambda i, j, k: (k, j)),
                  pl.BlockSpec((1, tn), lambda i, j, k: (0, j))],
        out_specs=pl.BlockSpec((tm, tn), lambda i, j, k: (i, j)),
        out_shape=jax.ShapeDtypeStruct((M, N), x2d.dtype),
        scratch_shapes=[pltpu.VMEM((tm, tn), jnp.float32)],
        compiler_params=pltpu.CompilerParams(
            dimension_semantics=("parallel", "parallel", "arbitrary"),
            vmem_limit_bytes=32 * 1024 * 1024),
    )(x2d, wt, bias.reshape(1, N))


# ------------------------- global/local attention kernel -----------------------

def _gl_attn_kernel(triu_ref, q_ref, k_ref, v_ref, ql_ref, kl_ref,
                    qr_ref, kr_ref, qloc_ref, kloc_ref,
                    out_ref, aw_ref, *, num_heads, num_hb, use_bf16_mxu):
    hb = pl.program_id(2)
    f32 = jnp.float32
    mxu_dt = jnp.bfloat16 if use_bf16_mxu else f32

    def mx(ref):
        return ref[0].astype(mxu_dt)        # (h_tile, rows, Dh)

    q, k, v = mx(q_ref), mx(k_ref), mx(v_ref)
    ql, kl = mx(ql_ref), mx(kl_ref)
    qr, kr = mx(qr_ref), mx(kr_ref)
    qloc, kloc = mx(qloc_ref), mx(kloc_ref)
    triu = triu_ref[...].astype(mxu_dt)     # (S, S) upper-tri incl. diagonal

    # batched q.k^T without explicit transposes: contract last dims, batch heads
    qk_dims = (((2,), (2,)), ((0,), (0,)))

    def _softmax(x):
        m = jnp.max(x, axis=-1, keepdims=True)
        e = jnp.exp(x - m)
        return e / jnp.sum(e, axis=-1, keepdims=True)

    # ---- prepare_local_masking (gumbel_alpha == 1.0, no padding mask) ----
    lw = lax.dot_general(ql, kl, qk_dims, preferred_element_type=f32)
    rw = lax.dot_general(qr, kr, qk_dims, preferred_element_type=f32)
    left_sm = _softmax(lw)                   # (ht, tT, S) f32
    right_sm = _softmax(rw)

    ht, tT, S = left_sm.shape
    l2 = left_sm.reshape(ht * tT, S).astype(mxu_dt)
    r2 = right_sm.reshape(ht * tT, S).astype(mxu_dt)
    # left_mask = L @ triu,  right_mask = R @ triu^T   (no transpose materialized)
    left_mask = lax.dot_general(l2, triu, (((1,), (0,)), ((), ())),
                                preferred_element_type=f32).reshape(ht, tT, S)
    right_mask = lax.dot_general(r2, triu, (((1,), (1,)), ((), ())),
                                 preferred_element_type=f32).reshape(ht, tT, S)
    # softmax row-sum identity: L @ (triu + triu^T) = 1 + L  =>  L @ triu^T = 1 + L - L@triu
    bw_left = 1.0 + left_sm - left_mask
    bw_right = 1.0 + right_sm - right_mask
    local_mask = left_mask * right_mask + bw_left * bw_right

    # ---- global + masked-local attention ----
    g = lax.dot_general(q, k, qk_dims, preferred_element_type=f32)
    loc = lax.dot_general(qloc, kloc, qk_dims, preferred_element_type=f32)
    attn_w = _softmax(g + loc * local_mask)  # (ht, tT, S) f32

    out = lax.dot_general(attn_w.astype(mxu_dt), v,
                          (((2,), (1,)), ((0,), (0,))),
                          preferred_element_type=f32)
    out_ref[...] = out.astype(out_ref.dtype)

    # ---- fused head-averaging of attention weights (accumulate across hb) ----
    aw_sum = jnp.sum(attn_w, axis=0, keepdims=True)   # (1, tT, S) f32

    @pl.when(hb == 0)
    def _():
        aw_ref[...] = jnp.zeros_like(aw_ref)

    aw_ref[...] += aw_sum

    @pl.when(hb == num_hb - 1)
    def _():
        aw_ref[...] = aw_ref[...] * (1.0 / num_heads)


def pallas_gl_attention(proj_heads, triu, B, H, Dh, T, S, *,
                        h_tile=None, t_tile_pref=128, use_bf16_mxu=False):
    """proj_heads: [9, B*H, T, Dh] fused head-major projections.
    Returns (attn [B*H, T, Dh], head-averaged attn weights [B, T, S])."""
    BH = B * H
    if h_tile is None:   # largest divisor of H that is <= 8
        h_tile = max(d for d in range(1, min(H, 8) + 1) if H % d == 0)
    assert H % h_tile == 0
    num_hb = H // h_tile
    t_tile = _pick_tile(T, t_tile_pref, 8)
    num_ti = T // t_tile

    def qmap(j):   # q-side chunks: T-tiled
        return lambda b, ti, hb: (j, b * num_hb + hb, ti, 0)

    def kmap(j):   # k-side chunks: full source length
        return lambda b, ti, hb: (j, b * num_hb + hb, 0, 0)

    q_block = (1, h_tile, t_tile, Dh)
    k_block = (1, h_tile, S, Dh)

    in_specs = [
        pl.BlockSpec((S, S), lambda b, ti, hb: (0, 0)),   # triu, stays resident
        pl.BlockSpec(q_block, qmap(0)),   # q       (scaling folded into weights)
        pl.BlockSpec(k_block, kmap(1)),   # k
        pl.BlockSpec(k_block, kmap(2)),   # v
        pl.BlockSpec(q_block, qmap(3)),   # q_left
        pl.BlockSpec(k_block, kmap(4)),   # k_left
        pl.BlockSpec(q_block, qmap(5)),   # q_right
        pl.BlockSpec(k_block, kmap(6)),   # k_right
        pl.BlockSpec(q_block, qmap(7)),   # q_local (scaling folded into weights)
        pl.BlockSpec(k_block, kmap(8)),   # k_local
    ]
    out_specs = [
        pl.BlockSpec((h_tile, t_tile, Dh),
                     lambda b, ti, hb: (b * num_hb + hb, ti, 0)),
        pl.BlockSpec((1, t_tile, S), lambda b, ti, hb: (b, ti, 0)),
    ]
    out_shape = [jax.ShapeDtypeStruct((BH, T, Dh), proj_heads.dtype),
                 jax.ShapeDtypeStruct((B, T, S), jnp.float32)]

    kernel = functools.partial(_gl_attn_kernel, num_heads=H, num_hb=num_hb,
                               use_bf16_mxu=use_bf16_mxu)
    return pl.pallas_call(
        kernel,
        grid=(B, num_ti, num_hb),
        in_specs=in_specs,
        out_specs=out_specs,
        out_shape=out_shape,
        compiler_params=pltpu.CompilerParams(
            dimension_semantics=("parallel", "parallel", "arbitrary"),
            vmem_limit_bytes=48 * 1024 * 1024),
    )(triu, *([proj_heads] * NUM_WEIGHTS))


# --------------------------- parameters & forward ------------------------------

def init_params(key, embed_dim):
    """Xavier-uniform weights / zero biases (mirrors reset_parameters)."""
    k1, k2 = jax.random.split(key)
    fan_out, fan_in = NUM_WEIGHTS * embed_dim, embed_dim
    b1 = (6.0 / (fan_in + fan_out)) ** 0.5
    in_proj_weight = jax.random.uniform(
        k1, (NUM_WEIGHTS * embed_dim, embed_dim), jnp.float32, -b1, b1)
    in_proj_bias = jnp.zeros((NUM_WEIGHTS * embed_dim,), jnp.float32)
    b2 = (6.0 / (embed_dim + embed_dim)) ** 0.5
    out_proj_weight = jax.random.uniform(
        k2, (embed_dim, embed_dim), jnp.float32, -b2, b2)
    out_proj_bias = jnp.zeros((embed_dim,), jnp.float32)
    return dict(in_proj_weight=in_proj_weight, in_proj_bias=in_proj_bias,
                out_proj_weight=out_proj_weight, out_proj_bias=out_proj_bias)


def prepare_params(params, embed_dim, num_heads):
    """Pre-transpose weights and fold the head_dim**-0.5 scaling of q / q_local
    into the corresponding rows of in_proj_weight / in_proj_bias."""
    E = embed_dim
    Dh = E // num_heads
    scaling = Dh ** (-0.5)
    scale_rows = jnp.ones((NUM_WEIGHTS,), jnp.float32).at[0].set(scaling).at[7].set(scaling)
    scale_vec = jnp.repeat(scale_rows, E)                       # [9E]
    w_scaled = params['in_proj_weight'] * scale_vec[:, None]    # [9E, E]
    b_scaled = params['in_proj_bias'] * scale_vec               # [9E]
    return dict(in_proj_wt=w_scaled.T,                          # [E, 9E]
                in_proj_bias=b_scaled,
                out_proj_wt=params['out_proj_weight'].T,        # [E, E]
                out_proj_bias=params['out_proj_bias'])


def gl_mha_forward(prep, query, num_heads, *, h_tile=None, t_tile_pref=128,
                   use_bf16_mxu=False):
    """Self-attention forward: query [T, B, E] -> (attn [T, B, E], attn_w [B, T, S])."""
    T, B, E = query.shape
    H = num_heads
    assert E % H == 0
    Dh = E // H
    S = T  # self-attention (qkv_same path)

    # fused in-projection (tiled Pallas matmul, scaling already folded into weights)
    x2d = query.reshape(T * B, E)
    proj = pallas_linear(x2d, prep['in_proj_wt'], prep['in_proj_bias'])   # [T*B, 9E]

    # single layout pass: [T*B, 9E] -> [9, B*H, T, Dh]  (replaces 9 split/transpose passes)
    proj_heads = (proj.reshape(T, B, NUM_WEIGHTS, H, Dh)
                      .transpose(2, 1, 3, 0, 4)
                      .reshape(NUM_WEIGHTS, B * H, T, Dh))

    triu = jnp.triu(jnp.ones((S, S), jnp.float32))

    attn_heads, attn_w = pallas_gl_attention(
        proj_heads, triu, B, H, Dh, T, S,
        h_tile=h_tile, t_tile_pref=t_tile_pref, use_bf16_mxu=use_bf16_mxu)

    # [B*H, T, Dh] -> [T*B, E] -> out_proj
    attn2d = (attn_heads.reshape(B, H, T, Dh)
                        .transpose(2, 0, 1, 3)
                        .reshape(T * B, E))
    attn = pallas_linear(attn2d, prep['out_proj_wt'],
                         prep['out_proj_bias']).reshape(T, B, E)
    return attn, attn_w


# --------------------------- pure-JAX reference --------------------------------

def reference_forward(params, query, num_heads):
    T, B, E = query.shape
    H = num_heads
    Dh = E // H
    scaling = Dh ** (-0.5)

    proj = query @ params['in_proj_weight'].T + params['in_proj_bias']
    (q, k, v, q_left, k_left,
     q_right, k_right, q_local, k_local) = jnp.split(proj, NUM_WEIGHTS, axis=-1)
    q = q * scaling
    q_local = q_local * scaling

    def to_heads(x):
        return x.reshape(T, B * H, Dh).transpose(1, 0, 2)

    qh, kh, vh = to_heads(q), to_heads(k), to_heads(v)
    qlh, klh = to_heads(q_left), to_heads(k_left)
    qrh, krh = to_heads(q_right), to_heads(k_right)
    qloch, kloch = to_heads(q_local), to_heads(k_local)

    g = jnp.einsum('btd,bsd->bts', qh, kh)
    loc = jnp.einsum('btd,bsd->bts', qloch, kloch)
    lw = jnp.einsum('btd,bsd->bts', qlh, klh)
    rw = jnp.einsum('btd,bsd->bts', qrh, krh)

    ls = jax.nn.softmax(lw, axis=-1)
    rs = jax.nn.softmax(rw, axis=-1)
    S = kh.shape[1]
    triu = jnp.triu(jnp.ones((S, S), jnp.float32))
    triu_t = triu.T
    local_mask = (ls @ triu) * (rs @ triu_t) + (ls @ triu_t) * (rs @ triu)

    aw = jax.nn.softmax(g + loc * local_mask, axis=-1)
    attn = jnp.einsum('bts,bsd->btd', aw, vh)
    attn = attn.transpose(1, 0, 2).reshape(T, B, E)
    attn = attn @ params['out_proj_weight'].T + params['out_proj_bias']
    aw = aw.reshape(B, H, T, S).sum(axis=1) / H
    return attn, aw


# ------------------------------------ main --------------------------------------

if __name__ == "__main__":
    embed_dim, num_heads = 32, 4
    tgt_len, bsz = 8, 2

    key = jax.random.PRNGKey(0)
    kp, kx = jax.random.split(key)
    params = init_params(kp, embed_dim)
    prep = prepare_params(params, embed_dim, num_heads)
    # layout: query is [tgt_len, bsz, embed_dim]  (Time x Batch x Channel)
    query = jax.random.normal(kx, (tgt_len, bsz, embed_dim), jnp.float32)

    attn, attn_w = gl_mha_forward(prep, query, num_heads)
    jax.block_until_ready((attn, attn_w))

    ref_attn, ref_aw = reference_forward(params, query, num_heads)
    assert attn.shape == (tgt_len, bsz, embed_dim)
    assert attn_w.shape == (bsz, tgt_len, tgt_len)
    assert jnp.allclose(attn, ref_attn, atol=2e-4, rtol=2e-4)
    assert jnp.allclose(attn_w, ref_aw, atol=2e-4, rtol=2e-4)

    print("KERNEL_OK")
</pallas_src>

<mosaic_0001>
module attributes {stable_mosaic.version = 11 : i64} {
  func.func @_linear_kernel(%arg0: i32, %arg1: i32, %arg2: i32, %arg3: memref<16x32xf32, #tpu.memory_space<vmem>>, %arg4: memref<32x288xf32, #tpu.memory_space<vmem>>, %arg5: memref<1x288xf32, #tpu.memory_space<vmem>>, %arg6: memref<16x288xf32, #tpu.memory_space<vmem>>, %arg7: memref<16x288xf32, #tpu.memory_space<vmem>>) attributes {dimension_semantics = [#tpu.dimension_semantics<parallel>, #tpu.dimension_semantics<parallel>, #tpu.dimension_semantics<arbitrary>], iteration_bounds = array<i64: 1, 1, 1>, scalar_prefetch = 0 : i64, scratch_operands = 1 : i64, tpu.core_type = #tpu.core_type<tc>, window_params = [{transform_indices = @transform_0, window_bounds = array<i64: 16, 32>}, {transform_indices = @transform_1, window_bounds = array<i64: 32, 288>}, {transform_indices = @transform_2, window_bounds = array<i64: 1, 288>}, {transform_indices = @transform_3, window_bounds = array<i64: 16, 288>}]} {
    %c0_i32 = arith.constant 0 : i32
    %0 = arith.cmpi eq, %arg2, %c0_i32 : i32
    %1 = arith.extui %0 : i1 to i32
    %c0_i32_0 = arith.constant 0 : i32
    %2 = arith.cmpi ne, %1, %c0_i32_0 : i32
    scf.if %2 {
      %cst_10 = arith.constant 0.000000e+00 : f32
      %12 = vector.broadcast %cst_10 : f32 to vector<16x288xf32>
      %c0_11 = arith.constant 0 : index
      %c0_12 = arith.constant 0 : index
      %13 = vector.load %arg7[%c0_11, %c0_12] : memref<16x288xf32, #tpu.memory_space<vmem>>, vector<16x288xf32>
      tpu.vector_store %arg7[%c0_11, %c0_12], %12 {strides = array<i32>} : memref<16x288xf32, #tpu.memory_space<vmem>>, vector<16x288xf32>,
    } else {
    }
    %c0 = arith.constant 0 : index
    %c0_1 = arith.constant 0 : index
    %3 = vector.load %arg7[%c0, %c0_1] : memref<16x288xf32, #tpu.memory_space<vmem>>, vector<16x288xf32>
    %c0_2 = arith.constant 0 : index
    %c0_3 = arith.constant 0 : index
    %4 = vector.load %arg3[%c0_2, %c0_3] : memref<16x32xf32, #tpu.memory_space<vmem>>, vector<16x32xf32>
    %c0_4 = arith.constant 0 : index
    %c0_5 = arith.constant 0 : index
    %5 = vector.load %arg4[%c0_4, %c0_5] : memref<32x288xf32, #tpu.memory_space<vmem>>, vector<32x288xf32>
    %cst = arith.constant dense<0.000000e+00> : vector<16x288xf32>
    %6 = tpu.matmul %4, %5, %cst {dimension_numbers = #tpu.dot_dimension_numbers<[1], [0], [0], [1], [0, 0, 1, 1], [], []>} : vector<16x32xf32>, vector<32x288xf32>, vector<16x288xf32> -> vector<16x288xf32>
    %7 = arith.addf %3, %6 : vector<16x288xf32>
    %c0_6 = arith.constant 0 : index
    %c0_7 = arith.constant 0 : index
    %8 = vector.load %arg7[%c0_6, %c0_7] : memref<16x288xf32, #tpu.memory_space<vmem>>, vector<16x288xf32>
    tpu.vector_store %arg7[%c0_6, %c0_7], %7 {strides = array<i32>} : memref<16x288xf32, #tpu.memory_space<vmem>>, vector<16x288xf32>,
    %c0_i32_8 = arith.constant 0 : i32
    %9 = arith.cmpi eq, %arg2, %c0_i32_8 : i32
    %10 = arith.extui %9 : i1 to i32
    %c0_i32_9 = arith.constant 0 : i32
    %11 = arith.cmpi ne, %10, %c0_i32_9 : i32
    scf.if %11 {
      %c0_10 = arith.constant 0 : index
      %c0_11 = arith.constant 0 : index
      %12 = vector.load %arg7[%c0_10, %c0_11] : memref<16x288xf32, #tpu.memory_space<vmem>>, vector<16x288xf32>
      %c0_12 = arith.constant 0 : index
      %c0_13 = arith.constant 0 : index
      %13 = vector.load %arg5[%c0_12, %c0_13] : memref<1x288xf32, #tpu.memory_space<vmem>>, vector<1x288xf32>
      %14 = vector.broadcast %13 : vector<1x288xf32> to vector<16x288xf32>
      %15 = arith.addf %12, %14 : vector<16x288xf32>
      %c0_14 = arith.constant 0 : index
      %c0_15 = arith.constant 0 : index
      %16 = vector.load %arg6[%c0_14, %c0_15] : memref<16x288xf32, #tpu.memory_space<vmem>>, vector<16x288xf32>
      tpu.vector_store %arg6[%c0_14, %c0_15], %15 {strides = array<i32>} : memref<16x288xf32, #tpu.memory_space<vmem>>, vector<16x288xf32>,
    } else {
    }
    return
  }
  func.func @transform_0(%arg0: i32, %arg1: i32, %arg2: i32) -> (i32, i32) {
    %c0_i32 = arith.constant 0 : i32
    return %arg0, %arg2 : i32, i32
  }
  func.func @transform_1(%arg0: i32, %arg1: i32, %arg2: i32) -> (i32, i32) {
    %c0_i32 = arith.constant 0 : i32
    return %arg2, %arg1 : i32, i32
  }
  func.func @transform_2(%arg0: i32, %arg1: i32, %arg2: i32) -> (i32, i32) {
    %c0_i32 = arith.constant 0 : i32
    %c0_i32_0 = arith.constant 0 : i32
    return %c0_i32, %arg1 : i32, i32
  }
  func.func @transform_3(%arg0: i32, %arg1: i32, %arg2: i32) -> (i32, i32) {
    %c0_i32 = arith.constant 0 : i32
    return %arg0, %arg1 : i32, i32
  }
}

</mosaic_0001>

<llo_original>
// kernel: tpu_custom_call.1
$region0: #{tpu_custom_call.1}
  #allocation0 [shape = 'u32[]', space=smem, size = 0x4, offset = 0x4, fixed_abs, tag = 'smem constant byte address 0x4 - core index']
  #allocation1 [shape = 'u32[72,128]{1,0:T(1,128)}', space=vmem, size = 0x9000, scoped, tag = 'internal scratch']
  #allocation2 [shape = 'f32[16,288]{1,0:T(8,128)}', space=vmem, size = 0x6000, scoped, tag = 'scratch operand']
  %s0 = inlined_call_operand.hbm [shape: f32[16,32], index: 0, kind: input, shape index: {}]
  %s1 = inlined_call_operand.hbm [shape: f32[32,288], index: 1, kind: input, shape index: {}]
  %s2 = inlined_call_operand.hbm [shape: f32[1,288], index: 2, kind: input, shape index: {}]
  %s3 = inlined_call_operand.hbm [shape: f32[16,288], index: 3, kind: output, shape index: {}]
  %s4 = sld [smem:[#allocation0]]
  $region42: #{tpu_custom_call.1} parent=0
    _
  %s6 = ssub.s32 1, %s4
  %s7 = scalar_select 0, %s6, %s4
  $region1: #{tpu_custom_call.1} parent=0
    #allocation3 [shape = 'u8[8192]{0}', space=vmem, size = 0x2000, scoped, tag = 'input window, operand 0, single buffered']
    #allocation4 [shape = 's32[1]{0}', space=sflag, size = 0x4, scoped, tag = 'scoped memory for tpu_custom_call.1']
    #allocation5 [shape = 's32[1]{0}', space=sflag, size = 0x4, scoped, tag = 'scoped memory for tpu_custom_call.1']
    #allocation6 [shape = 'u8[49152]{0}', space=vmem, size = 0xc000, scoped, tag = 'input window, operand 1, single buffered']
    #allocation7 [shape = 's32[1]{0}', space=sflag, size = 0x4, scoped, tag = 'scoped memory for tpu_custom_call.1']
    #allocation8 [shape = 'u8[1536]{0}', space=vmem, size = 0x800, scoped, tag = 'input window, operand 2, single buffered']
    #allocation9 [shape = 'u8[24576]{0}', space=vmem, size = 0x6000, scoped, tag = 'output window, operand 0, single buffered']
    %8 = vsyncpa [#allocation4], 0
    %9 = vsyncpa [#allocation7], 0
    %10 = vsyncpa [#allocation5], 0
    // Predicated region
    $region2: #{tpu_custom_call.1} parent=1 // pred_check
      _
    $region3: #{tpu_custom_call.1} parent=1 // pred_check_branch
      %12 = sbr.rel (0) target = $region5
    $region4: #{tpu_custom_call.1} parent=1 // pred_region
      %14 = vsyncadd [#allocation4], 0
      %s15 = sshll.u32 %s0, 4
      %s16 = int_to_ptr.hbm [resolvable:$true] %s15
      %s17 = sshll.u32 [#allocation3], 4
      %s18 = int_to_ptr.vmem [resolvable:$true] %s17
      %23 = dma.hbm_to_vmem [thread:$0]  %s16, 256, %s18, [#allocation4], 128, 128, 8
    $region5: #{tpu_custom_call.1} parent=1 // pred_fallthru
      _
    // Predicated region
    $region6: #{tpu_custom_call.1} parent=1 // pred_check
      _
    $region7: #{tpu_custom_call.1} parent=1 // pred_check_branch
      %25 = sbr.rel (0) target = $region9
    $region8: #{tpu_custom_call.1} parent=1 // pred_region
      %27 = vsyncadd [#allocation7], 0
      %s28 = sshll.u32 %s1, 4
      %s29 = int_to_ptr.hbm [resolvable:$true] %s28
      %s30 = sshll.u32 [#allocation6], 4
      %s31 = int_to_ptr.vmem [resolvable:$true] %s30
      %36 = dma.hbm_to_vmem [thread:$0]  %s29, 1536, %s31, [#allocation7], 384, 384, 24
    $region9: #{tpu_custom_call.1} parent=1 // pred_fallthru
      _
    // Predicated region
    $region10: #{tpu_custom_call.1} parent=1 // pred_check
      _
    $region11: #{tpu_custom_call.1} parent=1 // pred_check_branch
      %38 = sbr.rel (0) target = $region13
    $region12: #{tpu_custom_call.1} parent=1 // pred_region
      %40 = vsyncadd [#allocation7], 0
      %s42 = sshll.u32 %s2, 4
      %s43 = int_to_ptr.hbm [resolvable:$true] %s42
      %s44 = sshll.u32 [#allocation8], 4
      %s45 = int_to_ptr.vmem [resolvable:$true] %s44
      %47 = dma.hbm_to_vmem [thread:$0]  %s43, 48, %s45, [#allocation7]
    $region13: #{tpu_custom_call.1} parent=1 // pred_fallthru
      _
    // Predicated region
    $region14: #{tpu_custom_call.1} parent=1 // pred_check
      _
    $region15: #{tpu_custom_call.1} parent=1 // pred_check_branch
      %49 = sbr.rel (0) target = $region17
    $region16: #{tpu_custom_call.1} parent=1 // pred_region
      %51 = dma.done [#allocation4], 256
    $region17: #{tpu_custom_call.1} parent=1 // pred_fallthru
      _
    // Predicated region
    $region18: #{tpu_custom_call.1} parent=1 // pred_check
      _
    $region19: #{tpu_custom_call.1} parent=1 // pred_check_branch
      %53 = sbr.rel (0) target = $region21
    $region20: #{tpu_custom_call.1} parent=1 // pred_region
      %55 = dma.done [#allocation7], 1536
    $region21: #{tpu_custom_call.1} parent=1 // pred_fallthru
      _
    // Predicated region
    $region22: #{tpu_custom_call.1} parent=1 // pred_check
      _
    $region23: #{tpu_custom_call.1} parent=1 // pred_check_branch
      %57 = sbr.rel (0) target = $region25
    $region24: #{tpu_custom_call.1} parent=1 // pred_region
      %59 = dma.done [#allocation7], 48
    $region25: #{tpu_custom_call.1} parent=1 // pred_fallthru
      _
    %p60 = scmp.eq.s32.totalorder 0, 0
    // Predicated region
    $region26: #{tpu_custom_call.1} parent=1 // pred_check
      %p61 = pneg %p60
    $region27: #{tpu_custom_call.1} parent=1 // pred_check_branch
      %63 = sbr.rel (%p61) target = $region29
    $region28: #{tpu_custom_call.1} parent=1 // pred_region
      %64 = vst [vmem:[#allocation2] sm:$0xff] 0.0
      %65 = vst [vmem:[#allocation2 + $0x8] sm:$0xff] 0.0
      %vm66 = vcmask 261120
      %67 = vst.msk [vmem:[#allocation2 + $0x10] sm:$0xff] %vm66, 0.0
      %68 = vst [vmem:[#allocation2 + $0x18] sm:$0xff] 0.0
      %69 = vst [vmem:[#allocation2 + $0x20] sm:$0xff] 0.0
      %70 = vst.msk [vmem:[#allocation2 + $0x28] sm:$0xff] %vm66, 0.0
    $region29: #{tpu_custom_call.1} parent=1 // pred_fallthru
      _
    %v71 = vld [vmem:[#allocation2] sm:$0xff]
    %v72 = vld [vmem:[#allocation2 + $0x8] sm:$0xff]
    %v73 = vld [vmem:[#allocation2 + $0x10] sm:$0xff]
    %v74 = vld [vmem:[#allocation2 + $0x18] sm:$0xff]
    %v75 = vld [vmem:[#allocation2 + $0x20] sm:$0xff]
    %v76 = vld [vmem:[#allocation2 + $0x28] sm:$0xff]
    %v77 = vld [vmem:[#allocation3] sm:$0xff]
    %v78 = vld [vmem:[#allocation3 + $0x8] sm:$0xff]
    %v79 = vld [vmem:[#allocation6] sm:$0xff]
    %v80 = vld [vmem:[#allocation6 + $0x8] sm:$0xff]
    %v81 = vld [vmem:[#allocation6 + $0x10] sm:$0xff]
    %v82 = vld [vmem:[#allocation6 + $0x18] sm:$0xff]
    %v83 = vld [vmem:[#allocation6 + $0x20] sm:$0xff]
    %v84 = vld [vmem:[#allocation6 + $0x28] sm:$0xff]
    %v85 = vld [vmem:[#allocation6 + $0x30] sm:$0xff]
    %v86 = vld [vmem:[#allocation6 + $0x38] sm:$0xff]
    %v87 = vld [vmem:[#allocation6 + $0x40] sm:$0xff]
    %v88 = vld [vmem:[#allocation6 + $0x48] sm:$0xff]
    %v89 = vld [vmem:[#allocation6 + $0x50] sm:$0xff]
    %v90 = vld [vmem:[#allocation6 + $0x58] sm:$0xff]
    %vm91 = vcmask 261120
    %v93 = vsel %vm91, %v77, 0
    %v96 = vsel %vm91, %v78, 0
    %98 = vmatpush.msra.mxu0 0.0
    %99 = vmatpush.msra.mxu0 0.0
    %100 = vmatpush.msra.mxu0 0.0
    %101 = vmatpush.msra.mxu0 0.0
    %102 = vmatpush.msra.mxu0 0.0
    %103 = vmatpush.msra.mxu0 0.0
    %104 = vmatpush.msra.mxu0 0.0
    %105 = vmatpush.msra.mxu0 0.0
    %106 = vmatpush.msra.mxu0 0.0
    %107 = vmatpush.msra.mxu0 0.0
    %108 = vmatpush.msra.mxu0 0.0
    %109 = vmatpush.msra.mxu0 0.0
    %110 = vmatpush.msra.mxu0 %v88
    %111 = vmatpush.msra.mxu0 %v85
    %112 = vmatpush.msra.mxu0 %v82
    %113 = vmatpush.msra.mxu0 %v79
    %114 = vmatmul.f32.gmra.mxu0 %v93
    %v115 = vpop.f32.mrf.mxu0
    %v116 = vadd.f32 0.0, %v115
    %117 = vmatmul.f32.gmra.mxu0 %v96
    %v118 = vpop.f32.mrf.mxu0
    %v119 = vadd.f32 0.0, %v118
    %120 = vdwg.mxu0
    %121 = vmatpush.msra.mxu0 0.0
    %122 = vmatpush.msra.mxu0 0.0
    %123 = vmatpush.msra.mxu0 0.0
    %124 = vmatpush.msra.mxu0 0.0
    %125 = vmatpush.msra.mxu0 0.0
    %126 = vmatpush.msra.mxu0 0.0
    %127 = vmatpush.msra.mxu0 0.0
    %128 = vmatpush.msra.mxu0 0.0
    %129 = vmatpush.msra.mxu0 0.0
    %130 = vmatpush.msra.mxu0 0.0
    %131 = vmatpush.msra.mxu0 0.0
    %132 = vmatpush.msra.mxu0 0.0
    %133 = vmatpush.msra.mxu0 %v89
    %134 = vmatpush.msra.mxu0 %v86
    %135 = vmatpush.msra.mxu0 %v83
    %136 = vmatpush.msra.mxu0 %v80
    %137 = vmatmul.f32.gmra.mxu0 %v93
    %v138 = vpop.f32.mrf.mxu0
    %v139 = vadd.f32 0.0, %v138
    %140 = vmatmul.f32.gmra.mxu0 %v96
    %v141 = vpop.f32.mrf.mxu0
    %v142 = vadd.f32 0.0, %v141
    %143 = vdwg.mxu0
    %144 = vmatpush.msra.mxu0 0.0
    %145 = vmatpush.msra.mxu0 0.0
    %146 = vmatpush.msra.mxu0 0.0
    %147 = vmatpush.msra.mxu0 0.0
    %148 = vmatpush.msra.mxu0 0.0
    %149 = vmatpush.msra.mxu0 0.0
    %150 = vmatpush.msra.mxu0 0.0
    %151 = vmatpush.msra.mxu0 0.0
    %152 = vmatpush.msra.mxu0 0.0
    %153 = vmatpush.msra.mxu0 0.0
    %154 = vmatpush.msra.mxu0 0.0
    %155 = vmatpush.msra.mxu0 0.0
    %156 = vmatpush.msra.mxu0 %v90
    %157 = vmatpush.msra.mxu0 %v87
    %158 = vmatpush.msra.mxu0 %v84
    %159 = vmatpush.msra.mxu0 %v81
    %160 = vmatmul.f32.gmra.mxu0 %v93
    %v161 = vpop.f32.mrf.mxu0
    %v162 = vadd.f32 0.0, %v161
    %163 = vmatmul.f32.gmra.mxu0 %v96
    %v164 = vpop.f32.mrf.mxu0
    %v165 = vadd.f32 0.0, %v164
    %166 = vdwg.mxu0
    %v167 = vadd.f32 %v71, %v116
    %v168 = vadd.f32 %v72, %v139
    %v169 = vadd.f32 %v73, %v162
    %v170 = vadd.f32 %v74, %v119
    %v171 = vadd.f32 %v75, %v142
    %v172 = vadd.f32 %v76, %v165
    %173 = vst [vmem:[#allocation2] sm:$0xff] %v167
    %174 = vst [vmem:[#allocation2 + $0x8] sm:$0xff] %v168
    %175 = vst.msk [vmem:[#allocation2 + $0x10] sm:$0xff] %vm91, %v169
    %176 = vst [vmem:[#allocation2 + $0x18] sm:$0xff] %v170
    %177 = vst [vmem:[#allocation2 + $0x20] sm:$0xff] %v171
    %178 = vst.msk [vmem:[#allocation2 + $0x28] sm:$0xff] %vm91, %v172
    // Predicated region
    $region30: #{tpu_custom_call.1} parent=1 // pred_check
      %p179 = pneg %p60
    $region31: #{tpu_custom_call.1} parent=1 // pred_check_branch
      %181 = sbr.rel (%p179) target = $region33
    $region32: #{tpu_custom_call.1} parent=1 // pred_region
      %v182 = vld [vmem:[#allocation2] sm:$0xff]
      %v183 = vld [vmem:[#allocation2 + $0x8] sm:$0xff]
      %v184 = vld [vmem:[#allocation2 + $0x10] sm:$0xff]
      %v185 = vld [vmem:[#allocation2 + $0x18] sm:$0xff]
      %v186 = vld [vmem:[#allocation2 + $0x20] sm:$0xff]
      %v187 = vld [vmem:[#allocation2 + $0x28] sm:$0xff]
      %v188 = vld [vmem:[#allocation8] sm:$0x7]
      %v190 = vperm.slane %v188, 0
      %v191 = vperm.slane %v188, 1
      %v192 = vperm.slane %v188, 2
      %v196 = vadd.f32 %v182, %v190
      %v197 = vadd.f32 %v183, %v191
      %v198 = vadd.f32 %v184, %v192
      %v199 = vadd.f32 %v185, %v190
      %v200 = vadd.f32 %v186, %v191
      %v201 = vadd.f32 %v187, %v192
      %202 = vst [vmem:[#allocation9] sm:$0xff] %v196
      %203 = vst [vmem:[#allocation9 + $0x8] sm:$0xff] %v197
      %204 = vst.msk [vmem:[#allocation9 + $0x10] sm:$0xff] %vm91, %v198
      %205 = vst [vmem:[#allocation9 + $0x18] sm:$0xff] %v199
      %206 = vst [vmem:[#allocation9 + $0x20] sm:$0xff] %v200
      %207 = vst.msk [vmem:[#allocation9 + $0x28] sm:$0xff] %vm91, %v201
    $region33: #{tpu_custom_call.1} parent=1 // pred_fallthru
      _
    // Predicated region
    $region34: #{tpu_custom_call.1} parent=1 // pred_check
      _
    $region35: #{tpu_custom_call.1} parent=1 // pred_check_branch
      %209 = sbr.rel (0) target = $region37
    $region36: #{tpu_custom_call.1} parent=1 // pred_region
      %211 = vsyncadd [#allocation5], 0
      %s212 = sshll.u32 [#allocation9], 4
      %s213 = int_to_ptr.vmem [resolvable:$true] %s212
      %s214 = sshll.u32 %s3, 4
      %s215 = int_to_ptr.hbm [resolvable:$true] %s214
      %220 = dma.vmem_to_hbm [thread:$0]  %s213, 768, %s215, [#allocation5], 384, 384, 24
    $region37: #{tpu_custom_call.1} parent=1 // pred_fallthru
      _
    // Predicated region
    $region38: #{tpu_custom_call.1} parent=1 // pred_check
      _
    $region39: #{tpu_custom_call.1} parent=1 // pred_check_branch
      %222 = sbr.rel (0) target = $region41
    $region40: #{tpu_custom_call.1} parent=1 // pred_region
      %224 = dma.done [#allocation5], 768
    $region41: #{tpu_custom_call.1} parent=1 // pred_fallthru
      _
    %225 = vsyncpa [#allocation4], 1
    %226 = vsyncpa [#allocation7], 1
    %227 = vsyncpa [#allocation5], 1

</llo_original>
